<compile_context>
chip_gen: v6e
topology: v6e:2x2x1
jax: 0.10.0
libtpu: 0.0.40
codegen_flags: <defaults>
</compile_context>

<pallas_src>
import functools

import jax
import jax.numpy as jnp
from jax.experimental import pallas as pl
from jax.experimental.pallas import tpu as pltpu


def _rpn_head_kernel(xwin_ref, wconv_ref, bconv_ref, whead_ref, bhead_ref,
                     out_ref, *, wp, group_dy):
    """One (image, row-tile) per grid step, channel-major (NCHW-native).

    xwin_ref:  (1, 1, C, Fw)   bf16 halo'd row window, Fw = (TH+3)*Wp, flat
                               (row-major over padded rows of width Wp)
    wconv_ref: (C, 9*C)        bf16 3x3 conv weights, K index = (dy*3+dx)*C + cin
    bconv_ref: (C, 1)          f32
    whead_ref: (HEAD_PAD, C)   bf16 fused [cls | box] 1x1 weights (zero-padded rows)
    bhead_ref: (HEAD_PAD, 1)   f32
    out_ref:   (1, 1, HEAD_PAD, Ltile)  f32, Ltile = TH*Wp (valid cols are w < W)
    """
    ltile = out_ref.shape[3]
    cin = wconv_ref.shape[0]

    xw = xwin_ref[0, 0]                                   # (C, Fw) bf16

    # 3x3 conv as accumulating matmuls over the 9 taps (no im2col slab).
    acc = None
    if group_dy:
        # C small: stack the 3 dx taps of one kernel row -> K = 3C per matmul.
        for dy in range(3):
            s = dy * wp
            stack = jnp.concatenate(
                [xw[:, s + dx:s + dx + ltile] for dx in range(3)], axis=0)
            part = jnp.dot(wconv_ref[:, dy * 3 * cin:(dy * 3 + 3) * cin], stack,
                           preferred_element_type=jnp.float32)
            acc = part if acc is None else acc + part
    else:
        # C large: nine K=C matmuls, each lane-shifted view fed directly to MXU.
        for dy in range(3):
            for dx in range(3):
                k = dy * 3 + dx
                s = dy * wp + dx
                part = jnp.dot(wconv_ref[:, k * cin:(k + 1) * cin],
                               xw[:, s:s + ltile],
                               preferred_element_type=jnp.float32)
                acc = part if acc is None else acc + part

    t = jnp.maximum(acc + bconv_ref[...], 0.0)            # (C, Ltile) f32

    # Fused cls|box 1x1 heads: (HEAD_PAD, C) @ (C, Ltile) -> (HEAD_PAD, Ltile).
    head = jnp.dot(whead_ref[...], t.astype(whead_ref.dtype),
                   preferred_element_type=jnp.float32)
    out_ref[0, 0] = (head + bhead_ref[...]).astype(out_ref.dtype)


def _pick_row_tile(H, Wp, target):
    """Largest divisor of H that is <= target and keeps the tile lane-dense."""
    cands = [th for th in range(1, H + 1)
             if H % th == 0 and th <= target and th * Wp >= 128]
    return max(cands) if cands else H


def _rpn_head_level_xla(x_nchw, params):
    """Plain XLA path for tiny FPN levels (also used as the correctness ref)."""
    wconv, bconv, wcls, bcls, wbox, bbox_bias = params
    w_oihw = jnp.transpose(wconv, (3, 2, 0, 1))
    t = jax.lax.conv_general_dilated(x_nchw, w_oihw, (1, 1), "SAME")
    t = jnp.maximum(t + bconv.reshape(1, -1, 1, 1), 0.0)
    cls_w = jnp.transpose(wcls, (1, 0))[:, :, None, None]
    box_w = jnp.transpose(wbox, (1, 0))[:, :, None, None]
    logits = jax.lax.conv_general_dilated(t, cls_w, (1, 1), "VALID")
    logits = logits + bcls.reshape(1, -1, 1, 1)
    bbox = jax.lax.conv_general_dilated(t, box_w, (1, 1), "VALID")
    bbox = bbox + bbox_bias.reshape(1, -1, 1, 1)
    return logits, bbox


def rpn_head_level(x_nchw, params, *, row_tile=16):
    """Run the RPNHead on one feature level.

    x_nchw: (N, C, H, W) float32 (PyTorch layout)
    returns (logits (N, A, H, W), bbox (N, 4A, H, W)) in NCHW.

    row_tile: target rows per grid step.  For production FPN levels (C=256,
    ~200x336) use 32-64 so a double-buffered window (C*(TH+3)*Wp bf16) stays
    within the default scoped-VMEM budget on all generations incl. v7x.
    """
    wconv, bconv, wcls, bcls, wbox, bbox_bias = params
    N, C, H, W = x_nchw.shape
    A = wcls.shape[1]
    HEAD = 5 * A
    HEAD_PAD = ((HEAD + 7) // 8) * 8          # sublane-align the fused head (15 -> 16)

    Wp = W + 2
    if W >= 128:
        # Lane-align dy-tap offsets & output stores on large levels only
        # (for W=16/8 this would be an 8x column blowup).
        Wp = ((W + 2 + 127) // 128) * 128

    # Tiny levels: masked <128-lane stores + per-step overhead dominate; use XLA.
    if H * Wp < 128:
        return _rpn_head_level_xla(x_nchw, params)

    TH = _pick_row_tile(H, Wp, row_tile)
    R = H // TH
    Ltile = TH * Wp                            # flat output length per row tile
    Fw = (TH + 3) * Wp                         # halo'd window length (static slices)

    # Pad in NCHW (1 top, 2 bottom, 1 left, Wp-W-1 right), then build halo'd
    # row windows so each grid step DMAs only its own window (no overlapping
    # BlockSpecs needed; all in-kernel tap slices are static).
    xpad = jnp.pad(x_nchw, ((0, 0), (0, 0), (1, 2), (1, Wp - W - 1)))
    xwin = jnp.stack([xpad[:, :, r * TH:r * TH + TH + 3, :] for r in range(R)],
                     axis=1)                                    # (N, R, C, TH+3, Wp)
    xwin = xwin.reshape(N, R, C, Fw).astype(jnp.bfloat16)

    # Pack weights: 3x3 conv as (Cout, 9*Cin); fused cls|box head as (HEAD_PAD, C).
    # wconv is stored (dy, dx, cin, cout).
    wconv_mat = jnp.transpose(wconv, (3, 0, 1, 2)).reshape(C, 9 * C)
    wconv_mat = wconv_mat.astype(jnp.bfloat16)
    bconv_col = bconv.reshape(C, 1)
    whead = jnp.concatenate([wcls.T, wbox.T], axis=0)           # (5A, C)
    whead = jnp.pad(whead, ((0, HEAD_PAD - HEAD), (0, 0))).astype(jnp.bfloat16)
    bhead = jnp.concatenate([bcls.reshape(-1), bbox_bias.reshape(-1)])
    bhead = jnp.pad(bhead, (0, HEAD_PAD - HEAD))[:, None]       # (HEAD_PAD, 1)

    group_dy = C < 128                         # keep MXU contraction deep when C is small

    flops = 2 * N * H * Wp * (9 * C * C + C * HEAD)
    bytes_accessed = (xwin.size * 2 + wconv_mat.size * 2 + whead.size * 2
                      + (bconv_col.size + bhead.size) * 4
                      + N * R * HEAD_PAD * Ltile * 4)

    out = pl.pallas_call(
        functools.partial(_rpn_head_kernel, wp=Wp, group_dy=group_dy),
        out_shape=jax.ShapeDtypeStruct((N, R, HEAD_PAD, Ltile), jnp.float32),
        grid_spec=pltpu.PrefetchScalarGridSpec(
            num_scalar_prefetch=0,
            grid=(N, R),                        # spatial axis innermost
            in_specs=[
                pl.BlockSpec((1, 1, C, Fw), lambda n, r: (n, r, 0, 0)),
                pl.BlockSpec((C, 9 * C), lambda n, r: (0, 0)),        # weights stay
                pl.BlockSpec((C, 1), lambda n, r: (0, 0)),            # resident in
                pl.BlockSpec((HEAD_PAD, C), lambda n, r: (0, 0)),     # VMEM (constant
                pl.BlockSpec((HEAD_PAD, 1), lambda n, r: (0, 0)),     # block index)
            ],
            out_specs=pl.BlockSpec((1, 1, HEAD_PAD, Ltile),
                                   lambda n, r: (n, r, 0, 0)),
        ),
        compiler_params=pltpu.CompilerParams(
            dimension_semantics=("parallel", "parallel")),
        cost_estimate=pl.CostEstimate(flops=flops, transcendentals=0,
                                      bytes_accessed=bytes_accessed),
    )(xwin, wconv_mat, bconv_col, whead, bhead)

    # Reassemble NCHW: (N, R, HEAD_PAD, TH, Wp) -> (N, HEAD_PAD, H, Wp),
    # drop padded head rows and padded columns.
    out = out.reshape(N, R, HEAD_PAD, TH, Wp)
    out = jnp.transpose(out, (0, 2, 1, 3, 4)).reshape(N, HEAD_PAD, H, Wp)
    out = out[:, :HEAD, :, :W]
    logits = out[:, :A]
    bbox = out[:, A:]
    return logits, bbox


def rpn_forward(features, params):
    """RPN.forward (test path, compute part): RPNHead over all feature levels."""
    logits, bbox_reg = [], []
    for feat in features:
        l, b = rpn_head_level(feat, params)
        logits.append(l)
        bbox_reg.append(b)
    return logits, bbox_reg


def init_rpn_head_params(key, in_channels, num_anchors):
    """Matches RPNHead.__init__: normal(std=0.01) weights, zero biases."""
    k1, k2, k3 = jax.random.split(key, 3)
    C, A = in_channels, num_anchors
    # 3x3 conv stored as (kh, kw, Cin, Cout); 1x1 convs as (Cin, Cout).
    wconv = 0.01 * jax.random.normal(k1, (3, 3, C, C), jnp.float32)
    bconv = jnp.zeros((1, C), jnp.float32)
    wcls = 0.01 * jax.random.normal(k2, (C, A), jnp.float32)
    bcls = jnp.zeros((1, A), jnp.float32)
    wbox = 0.01 * jax.random.normal(k3, (C, 4 * A), jnp.float32)
    bbox_bias = jnp.zeros((1, 4 * A), jnp.float32)
    return (wconv, bconv, wcls, bcls, wbox, bbox_bias)


if __name__ == "__main__":
    key = jax.random.PRNGKey(0)
    kp, kf0, kf1 = jax.random.split(key, 3)

    N = 2
    C = 32          # in_channels
    A = 3           # num_anchors_per_location (3 ratios per FPN level)

    params = init_rpn_head_params(kp, C, A)

    # Two small FPN feature levels, PyTorch NCHW layout.
    #  - (32, 16): Pallas path with 2 halo'd row tiles per image (TH=16).
    #  - (8, 8):   tiny level -> dispatched to the plain-XLA path.
    features = [
        jax.random.normal(kf0, (N, C, 32, 16), jnp.float32),
        jax.random.normal(kf1, (N, C, 8, 8), jnp.float32),
    ]

    logits, bbox_reg = rpn_forward(features, params)
    jax.block_until_ready((logits, bbox_reg))

    # Cross-check against a pure-JAX f32 reference (kernel uses bf16 MXU inputs
    # with f32 accumulation -> loosened tolerance).
    for feat, lg, bb in zip(features, logits, bbox_reg):
        rl, rb = _rpn_head_level_xla(feat, params)
        assert lg.shape == rl.shape and bb.shape == rb.shape
        assert jnp.allclose(lg, rl, atol=3e-3, rtol=3e-2)
        assert jnp.allclose(bb, rb, atol=3e-3, rtol=3e-2)

    print("KERNEL_OK")
</pallas_src>

<mosaic_0001>
module attributes {stable_mosaic.version = 11 : i64} {
  func.func @_rpn_head_kernel(%arg0: i32, %arg1: i32, %arg2: memref<1x1x32x342xbf16, #tpu.memory_space<vmem>>, %arg3: memref<32x288xbf16, #tpu.memory_space<vmem>>, %arg4: memref<32x1xf32, #tpu.memory_space<vmem>>, %arg5: memref<16x32xbf16, #tpu.memory_space<vmem>>, %arg6: memref<16x1xf32, #tpu.memory_space<vmem>>, %arg7: memref<1x1x16x288xf32, #tpu.memory_space<vmem>>) attributes {dimension_semantics = [#tpu.dimension_semantics<parallel>, #tpu.dimension_semantics<parallel>], iteration_bounds = array<i64: 2, 2>, scalar_prefetch = 0 : i64, scratch_operands = 0 : i64, tpu.core_type = #tpu.core_type<tc>, window_params = [{transform_indices = @transform_0, window_bounds = array<i64: 1, 1, 32, 342>}, {pipeline_mode = #tpu.pipeline_mode<synchronous>, transform_indices = @transform_1, window_bounds = array<i64: 32, 288>}, {pipeline_mode = #tpu.pipeline_mode<synchronous>, transform_indices = @transform_2, window_bounds = array<i64: 32, 1>}, {pipeline_mode = #tpu.pipeline_mode<synchronous>, transform_indices = @transform_3, window_bounds = array<i64: 16, 32>}, {pipeline_mode = #tpu.pipeline_mode<synchronous>, transform_indices = @transform_4, window_bounds = array<i64: 16, 1>}, {transform_indices = @transform_5, window_bounds = array<i64: 1, 1, 16, 288>}]} {
    %c0 = arith.constant 0 : index
    %c0_0 = arith.constant 0 : index
    %c0_1 = arith.constant 0 : index
    %c0_2 = arith.constant 0 : index
    %0 = vector.load %arg2[%c0, %c0_0, %c0_1, %c0_2] : memref<1x1x32x342xbf16, #tpu.memory_space<vmem>>, vector<1x1x32x342xbf16>
    %1 = vector.shape_cast %0 : vector<1x1x32x342xbf16> to vector<32x342xbf16>
    %2 = vector.extract_strided_slice %1 {offsets = [0, 0], sizes = [32, 288], strides = [1, 1]} : vector<32x342xbf16> to vector<32x288xbf16>
    %3 = vector.extract_strided_slice %1 {offsets = [0, 1], sizes = [32, 288], strides = [1, 1]} : vector<32x342xbf16> to vector<32x288xbf16>
    %4 = vector.extract_strided_slice %1 {offsets = [0, 2], sizes = [32, 288], strides = [1, 1]} : vector<32x342xbf16> to vector<32x288xbf16>
    %5 = tpu.concatenate %2, %3, %4 in 0 : vector<32x288xbf16>, vector<32x288xbf16>, vector<32x288xbf16> -> vector<96x288xbf16>
    %c0_3 = arith.constant 0 : index
    %c0_4 = arith.constant 0 : index
    %6 = vector.load %arg3[%c0_3, %c0_4] : memref<32x288xbf16, #tpu.memory_space<vmem>>, vector<32x96xbf16>
    %cst = arith.constant dense<0.000000e+00> : vector<32x288xf32>
    %7 = tpu.matmul %6, %5, %cst {dimension_numbers = #tpu.dot_dimension_numbers<[1], [0], [0], [1], [0, 0, 1, 1], [], []>} : vector<32x96xbf16>, vector<96x288xbf16>, vector<32x288xf32> -> vector<32x288xf32>
    %8 = vector.extract_strided_slice %1 {offsets = [0, 18], sizes = [32, 288], strides = [1, 1]} : vector<32x342xbf16> to vector<32x288xbf16>
    %9 = vector.extract_strided_slice %1 {offsets = [0, 19], sizes = [32, 288], strides = [1, 1]} : vector<32x342xbf16> to vector<32x288xbf16>
    %10 = vector.extract_strided_slice %1 {offsets = [0, 20], sizes = [32, 288], strides = [1, 1]} : vector<32x342xbf16> to vector<32x288xbf16>
    %11 = tpu.concatenate %8, %9, %10 in 0 : vector<32x288xbf16>, vector<32x288xbf16>, vector<32x288xbf16> -> vector<96x288xbf16>
    %c0_5 = arith.constant 0 : index
    %c96 = arith.constant 96 : index
    %12 = vector.load %arg3[%c0_5, %c96] : memref<32x288xbf16, #tpu.memory_space<vmem>>, vector<32x96xbf16>
    %cst_6 = arith.constant dense<0.000000e+00> : vector<32x288xf32>
    %13 = tpu.matmul %12, %11, %cst_6 {dimension_numbers = #tpu.dot_dimension_numbers<[1], [0], [0], [1], [0, 0, 1, 1], [], []>} : vector<32x96xbf16>, vector<96x288xbf16>, vector<32x288xf32> -> vector<32x288xf32>
    %14 = arith.addf %7, %13 : vector<32x288xf32>
    %15 = vector.extract_strided_slice %1 {offsets = [0, 36], sizes = [32, 288], strides = [1, 1]} : vector<32x342xbf16> to vector<32x288xbf16>
    %16 = vector.extract_strided_slice %1 {offsets = [0, 37], sizes = [32, 288], strides = [1, 1]} : vector<32x342xbf16> to vector<32x288xbf16>
    %17 = vector.extract_strided_slice %1 {offsets = [0, 38], sizes = [32, 288], strides = [1, 1]} : vector<32x342xbf16> to vector<32x288xbf16>
    %18 = tpu.concatenate %15, %16, %17 in 0 : vector<32x288xbf16>, vector<32x288xbf16>, vector<32x288xbf16> -> vector<96x288xbf16>
    %c0_7 = arith.constant 0 : index
    %c192 = arith.constant 192 : index
    %19 = vector.load %arg3[%c0_7, %c192] : memref<32x288xbf16, #tpu.memory_space<vmem>>, vector<32x96xbf16>
    %cst_8 = arith.constant dense<0.000000e+00> : vector<32x288xf32>
    %20 = tpu.matmul %19, %18, %cst_8 {dimension_numbers = #tpu.dot_dimension_numbers<[1], [0], [0], [1], [0, 0, 1, 1], [], []>} : vector<32x96xbf16>, vector<96x288xbf16>, vector<32x288xf32> -> vector<32x288xf32>
    %21 = arith.addf %14, %20 : vector<32x288xf32>
    %c0_9 = arith.constant 0 : index
    %c0_10 = arith.constant 0 : index
    %22 = vector.load %arg4[%c0_9, %c0_10] : memref<32x1xf32, #tpu.memory_space<vmem>>, vector<32x1xf32>
    %23 = vector.broadcast %22 : vector<32x1xf32> to vector<32x288xf32>
    %24 = arith.addf %21, %23 : vector<32x288xf32>
    %cst_11 = arith.constant 0.000000e+00 : f32
    %25 = vector.broadcast %cst_11 : f32 to vector<32x288xf32>
    %26 = arith.maximumf %24, %25 : vector<32x288xf32>
    %c0_12 = arith.constant 0 : index
    %c0_13 = arith.constant 0 : index
    %27 = vector.load %arg5[%c0_12, %c0_13] : memref<16x32xbf16, #tpu.memory_space<vmem>>, vector<16x32xbf16>
    %28 = arith.truncf %26 : vector<32x288xf32> to vector<32x288xbf16>
    %cst_14 = arith.constant dense<0.000000e+00> : vector<16x288xf32>
    %29 = tpu.matmul %27, %28, %cst_14 {dimension_numbers = #tpu.dot_dimension_numbers<[1], [0], [0], [1], [0, 0, 1, 1], [], []>} : vector<16x32xbf16>, vector<32x288xbf16>, vector<16x288xf32> -> vector<16x288xf32>
    %c0_15 = arith.constant 0 : index
    %c0_16 = arith.constant 0 : index
    %30 = vector.load %arg6[%c0_15, %c0_16] : memref<16x1xf32, #tpu.memory_space<vmem>>, vector<16x1xf32>
    %31 = vector.broadcast %30 : vector<16x1xf32> to vector<16x288xf32>
    %32 = arith.addf %29, %31 : vector<16x288xf32>
    %c0_17 = arith.constant 0 : index
    %c0_18 = arith.constant 0 : index
    %c0_19 = arith.constant 0 : index
    %c0_20 = arith.constant 0 : index
    %33 = vector.load %arg7[%c0_17, %c0_18, %c0_19, %c0_20] : memref<1x1x16x288xf32, #tpu.memory_space<vmem>>, vector<1x1x16x288xf32>
    %34 = vector.shape_cast %33 : vector<1x1x16x288xf32> to vector<16x288xf32>
    %35 = vector.shape_cast %32 : vector<16x288xf32> to vector<1x1x16x288xf32>
    tpu.vector_store %arg7[%c0_17, %c0_18, %c0_19, %c0_20], %35 {strides = array<i32>} : memref<1x1x16x288xf32, #tpu.memory_space<vmem>>, vector<1x1x16x288xf32>,
    return
  }
  func.func @transform_0(%arg0: i32, %arg1: i32) -> (i32, i32, i32, i32) {
    %c0_i32 = arith.constant 0 : i32
    %c0_i32_0 = arith.constant 0 : i32
    %c0_i32_1 = arith.constant 0 : i32
    return %arg0, %arg1, %c0_i32, %c0_i32_0 : i32, i32, i32, i32
  }
  func.func @transform_1(%arg0: i32, %arg1: i32) -> (i32, i32) {
    %c0_i32 = arith.constant 0 : i32
    %c0_i32_0 = arith.constant 0 : i32
    %c0_i32_1 = arith.constant 0 : i32
    return %c0_i32, %c0_i32_0 : i32, i32
  }
  func.func @transform_2(%arg0: i32, %arg1: i32) -> (i32, i32) {
    %c0_i32 = arith.constant 0 : i32
    %c0_i32_0 = arith.constant 0 : i32
    %c0_i32_1 = arith.constant 0 : i32
    return %c0_i32, %c0_i32_0 : i32, i32
  }
  func.func @transform_3(%arg0: i32, %arg1: i32) -> (i32, i32) {
    %c0_i32 = arith.constant 0 : i32
    %c0_i32_0 = arith.constant 0 : i32
    %c0_i32_1 = arith.constant 0 : i32
    return %c0_i32, %c0_i32_0 : i32, i32
  }
  func.func @transform_4(%arg0: i32, %arg1: i32) -> (i32, i32) {
    %c0_i32 = arith.constant 0 : i32
    %c0_i32_0 = arith.constant 0 : i32
    %c0_i32_1 = arith.constant 0 : i32
    return %c0_i32, %c0_i32_0 : i32, i32
  }
  func.func @transform_5(%arg0: i32, %arg1: i32) -> (i32, i32, i32, i32) {
    %c0_i32 = arith.constant 0 : i32
    %c0_i32_0 = arith.constant 0 : i32
    %c0_i32_1 = arith.constant 0 : i32
    return %arg0, %arg1, %c0_i32, %c0_i32_0 : i32, i32, i32, i32
  }
}

</mosaic_0001>

<llo_original>
// kernel: tpu_custom_call.1
$region0: #{tpu_custom_call.1}
  #allocation0 [shape = 'u32[]', space=smem, size = 0x4, offset = 0x4, fixed_abs, tag = 'smem constant byte address 0x4 - core index']
  #allocation1 [shape = 'u32[144,128]{1,0:T(1,128)}', space=vmem, size = 0x12000, scoped, tag = 'internal scratch']
  %s0 = inlined_call_operand.hbm [shape: bf16[2,2,32,342], index: 0, kind: input, shape index: {}]
  %s1 = inlined_call_operand.vmem [shape: bf16[32,288], index: 1, kind: input, shape index: {}]
  %s2 = inlined_call_operand.vmem [shape: f32[32,1], index: 2, kind: input, shape index: {}]
  %s3 = inlined_call_operand.hbm [shape: bf16[16,32], index: 3, kind: input, shape index: {}]
  %s4 = inlined_call_operand.vmem [shape: f32[16,1], index: 4, kind: input, shape index: {}]
  %s5 = inlined_call_operand.hbm [shape: f32[2,2,16,288], index: 5, kind: output, shape index: {}]
  %s6 = sld [smem:[#allocation0]]
  $region61: #{tpu_custom_call.1} parent=0
    _
  %s8 = ssub.s32 1, %s6
  %s9 = scalar_select 0, %s8, %s6
  $region1: #{tpu_custom_call.1} parent=0
    #allocation2 [shape = 'u8[49152]{0}', space=vmem, size = 0xc000, scoped, tag = 'input window, operand 0']
    #allocation3 [shape = 's32[2]{0}', space=sflag, size = 0x8, scoped, tag = 'scoped memory for tpu_custom_call.1']
    #allocation4 [shape = 's32[2]{0}', space=sflag, size = 0x8, scoped, tag = 'scoped memory for tpu_custom_call.1']
    #allocation5 [shape = 'u8[4096]{0}', space=vmem, size = 0x1000, scoped, tag = 'input window, operand 3, single buffered']
    #allocation6 [shape = 's32[1]{0}', space=sflag, size = 0x4, scoped, tag = 'scoped memory for tpu_custom_call.1']
    #allocation7 [shape = 'u8[49152]{0}', space=vmem, size = 0xc000, scoped, tag = 'output window, operand 0']
    %10 = vsyncpa [#allocation3], 0
    %s11 = scalar_lea.sflag [#allocation3], 1
    %12 = vsyncpa %s11, 0
    %13 = vsyncpa [#allocation6], 0
    %14 = vsyncpa [#allocation4], 0
    %s15 = scalar_lea.sflag [#allocation4], 1
    %16 = vsyncpa %s15, 0
    loop: start=0, step=1, limit=6
    $region2: #{tpu_custom_call.1} parent=1 // loop_pre_header
      _
    $region3: #{tpu_custom_call.1} parent=1 // loop_header
      %s18 = sphi 0, %s22
      %p19 = scmp.ge.s32.totalorder %s18, 6
      %s25 = sphi 0, %s37
      %s26 = sphi 0, %s33
      %s27 = sphi 0, %s25
      %s28 = sphi 0, %s26
      %s29 = sphi 0, %s27
      %s30 = sphi 0, %s28
      %s42 = sphi 0, %s44
      %s45 = sphi 0, %s42
      %s46 = sphi 0, %s45
      %s62 = sphi 0, %s46
      %s66 = sphi 0, %s66
      %s68 = sphi 0, %s66
      %s69 = sphi 0, %s68
      %s83 = sphi 0, %s69
      %s87 = sphi 0, %s87
      %s89 = sphi 0, %s87
      %s90 = sphi 0, %s89
      %s104 = sphi 0, %s90
      %s108 = sphi 0, %s108
      %s110 = sphi 0, %s108
      %s111 = sphi 0, %s110
      %s125 = sphi 0, %s111
      %s129 = sphi 0, %s129
      %s131 = sphi 0, %s129
      %s132 = sphi 0, %s131
      %s146 = sphi 0, %s132
      %s154 = sphi 0, %s156
      %s157 = sphi 0, %s154
      %s158 = sphi 0, %s157
      %s174 = sphi 0, %s158
    $region4: #{tpu_custom_call.1} parent=1 // loop_header_branch
      %21 = sbr.rel (%p19) target = $region8
    $region5: #{tpu_custom_call.1} parent=1 // loop_body
      %s23 = ssub.s32 %s18, 1
      %s24 = ssub.s32 %s18, 2
      %s31 = sadd.s32 1, %s26
      %p32 = scmp.ge.s32.totalorder %s31, 2
      %s33 = scalar_select %p32, 0, %s31
      %s34 = sadd.s32 1, %s25
      %s35 = scalar_select %p32, %s34, %s25
      %p36 = scmp.ge.s32.totalorder %s35, 2
      %s37 = scalar_select %p36, 0, %s35
      %s38 = ssub.s32 %s25, %s37
      %s39 = ssub.s32 %s26, %s33
      %s40 = sor.u32 %s38, %s39
      %p41 = scmp.eq.s32.totalorder %s40, 0
      %s43 = sadd.s32 %s42, 1
      %s44 = scalar_select %p41, %s42, %s43
      %p47 = pneg %p41
      %p48 = scmp.eq.s32.totalorder %s18, 3
      %p49 = por %p47, %p48
      %p50 = scmp.ne.s32.totalorder %s42, %s45
      %p51 = scmp.eq.s32.totalorder %s18, 0
      %p52 = por %p50, %p51
      %p53 = scmp.ne.s32.totalorder %s42, %s45
      %p54 = scmp.eq.s32.totalorder %s23, 3
      %p55 = por %p53, %p54
      %p56 = scmp.ne.s32.totalorder %s45, %s46
      %p57 = scmp.eq.s32.totalorder %s23, 0
      %p58 = por %p56, %p57
      %p59 = scmp.ne.s32.totalorder %s45, %s46
      %p60 = scmp.eq.s32.totalorder %s24, 3
      %p61 = por %p59, %p60
      %p63 = scmp.ne.s32.totalorder %s46, %s62
      %p64 = scmp.eq.s32.totalorder %s24, 0
      %p65 = por %p63, %p64
      %s67 = sadd.s32 %s66, 1
      %p70 = scmp.eq.s32.totalorder %s18, 3
      %p71 = scmp.ne.s32.totalorder %s66, %s68
      %p72 = scmp.eq.s32.totalorder %s18, 0
      %p73 = por %p71, %p72
      %p74 = scmp.ne.s32.totalorder %s66, %s68
      %p75 = scmp.eq.s32.totalorder %s23, 3
      %p76 = por %p74, %p75
      %p77 = scmp.ne.s32.totalorder %s68, %s69
      %p78 = scmp.eq.s32.totalorder %s23, 0
      %p79 = por %p77, %p78
      %p80 = scmp.ne.s32.totalorder %s68, %s69
      %p81 = scmp.eq.s32.totalorder %s24, 3
      %p82 = por %p80, %p81
      %p84 = scmp.ne.s32.totalorder %s69, %s83
      %p85 = scmp.eq.s32.totalorder %s24, 0
      %p86 = por %p84, %p85
      %s88 = sadd.s32 %s87, 1
      %p91 = scmp.eq.s32.totalorder %s18, 3
      %p92 = scmp.ne.s32.totalorder %s87, %s89
      %p93 = scmp.eq.s32.totalorder %s18, 0
      %p94 = por %p92, %p93
      %p95 = scmp.ne.s32.totalorder %s87, %s89
      %p96 = scmp.eq.s32.totalorder %s23, 3
      %p97 = por %p95, %p96
      %p98 = scmp.ne.s32.totalorder %s89, %s90
      %p99 = scmp.eq.s32.totalorder %s23, 0
      %p100 = por %p98, %p99
      %p101 = scmp.ne.s32.totalorder %s89, %s90
      %p102 = scmp.eq.s32.totalorder %s24, 3
      %p103 = por %p101, %p102
      %p105 = scmp.ne.s32.totalorder %s90, %s104
      %p106 = scmp.eq.s32.totalorder %s24, 0
      %p107 = por %p105, %p106
      %s109 = sadd.s32 %s108, 1
      %p112 = scmp.eq.s32.totalorder %s18, 3
      %p113 = scmp.ne.s32.totalorder %s108, %s110
      %p114 = scmp.eq.s32.totalorder %s18, 0
      %p115 = por %p113, %p114
      %p116 = scmp.ne.s32.totalorder %s108, %s110
      %p117 = scmp.eq.s32.totalorder %s23, 3
      %p118 = por %p116, %p117
      %p119 = scmp.ne.s32.totalorder %s110, %s111
      %p120 = scmp.eq.s32.totalorder %s23, 0
      %p121 = por %p119, %p120
      %p122 = scmp.ne.s32.totalorder %s110, %s111
      %p123 = scmp.eq.s32.totalorder %s24, 3
      %p124 = por %p122, %p123
      %p126 = scmp.ne.s32.totalorder %s111, %s125
      %p127 = scmp.eq.s32.totalorder %s24, 0
      %p128 = por %p126, %p127
      %s130 = sadd.s32 %s129, 1
      %p133 = scmp.eq.s32.totalorder %s18, 3
      %p134 = scmp.ne.s32.totalorder %s129, %s131
      %p135 = scmp.eq.s32.totalorder %s18, 0
      %p136 = por %p134, %p135
      %p137 = scmp.ne.s32.totalorder %s129, %s131
      %p138 = scmp.eq.s32.totalorder %s23, 3
      %p139 = por %p137, %p138
      %p140 = scmp.ne.s32.totalorder %s131, %s132
      %p141 = scmp.eq.s32.totalorder %s23, 0
      %p142 = por %p140, %p141
      %p143 = scmp.ne.s32.totalorder %s131, %s132
      %p144 = scmp.eq.s32.totalorder %s24, 3
      %p145 = por %p143, %p144
      %p147 = scmp.ne.s32.totalorder %s132, %s146
      %p148 = scmp.eq.s32.totalorder %s24, 0
      %p149 = por %p147, %p148
      %s150 = ssub.s32 %s25, %s37
      %s151 = ssub.s32 %s26, %s33
      %s152 = sor.u32 %s150, %s151
      %p153 = scmp.eq.s32.totalorder %s152, 0
      %s155 = sadd.s32 %s154, 1
      %s156 = scalar_select %p153, %s154, %s155
      %p159 = pneg %p153
      %p160 = scmp.eq.s32.totalorder %s18, 3
      %p161 = por %p159, %p160
      %p162 = scmp.ne.s32.totalorder %s154, %s157
      %p163 = scmp.eq.s32.totalorder %s18, 0
      %p164 = por %p162, %p163
      %p165 = scmp.ne.s32.totalorder %s154, %s157
      %p166 = scmp.eq.s32.totalorder %s23, 3
      %p167 = por %p165, %p166
      %p168 = scmp.ne.s32.totalorder %s157, %s158
      %p169 = scmp.eq.s32.totalorder %s23, 0
      %p170 = por %p168, %p169
      %p171 = scmp.ne.s32.totalorder %s157, %s158
      %p172 = scmp.eq.s32.totalorder %s24, 3
      %p173 = por %p171, %p172
      %p175 = scmp.ne.s32.totalorder %s158, %s174
      %p176 = scmp.eq.s32.totalorder %s24, 0
      %p177 = por %p175, %p176
      %p178 = scmp.le.s32.totalorder 1, %s18
      %p179 = scmp.lt.s32.totalorder %s18, 5
      %p180 = pnand %p178, %p179
      %p181 = pneg %p180
      // Predicated region
      $region9: #{tpu_custom_call.1} parent=5 // pred_check
        _
      $region10: #{tpu_custom_call.1} parent=5 // pred_check_branch
        %183 = sbr.rel (%p180) target = $region12
      $region11: #{tpu_custom_call.1} parent=5 // pred_region
        %s184 = ssub.s32 %s18, 1
        // Predicated region
        $region13: #{tpu_custom_call.1} parent=11 // pred_check
          %p185 = pneg %p79
        $region14: #{tpu_custom_call.1} parent=11 // pred_check_branch
          %187 = sbr.rel (%p185) target = $region16
        $region15: #{tpu_custom_call.1} parent=11 // pred_region
          _
        $region16: #{tpu_custom_call.1} parent=11 // pred_fallthru
          _
        // Predicated region
        $region17: #{tpu_custom_call.1} parent=11 // pred_check
          %p188 = pneg %p100
        $region18: #{tpu_custom_call.1} parent=11 // pred_check_branch
          %190 = sbr.rel (%p188) target = $region20
        $region19: #{tpu_custom_call.1} parent=11 // pred_region
          _
        $region20: #{tpu_custom_call.1} parent=11 // pred_fallthru
          _
        // Predicated region
        $region21: #{tpu_custom_call.1} parent=11 // pred_check
          %p191 = pneg %p121
        $region22: #{tpu_custom_call.1} parent=11 // pred_check_branch
          %193 = sbr.rel (%p191) target = $region24
        $region23: #{tpu_custom_call.1} parent=11 // pred_region
          %s195 = ssub.s32 128, 128
          %196 = vsyncadd [#allocation6], %s195
          %s197 = sshll.u32 [#allocation5], 4
          %s198 = int_to_ptr.vmem [resolvable:$true] %s197
          %203 = dma.hbm_to_vmem [thread:$0]  %s3, 128, %s198, [#allocation6], 64, 64, 4
        $region24: #{tpu_custom_call.1} parent=11 // pred_fallthru
          _
        // Predicated region
        $region25: #{tpu_custom_call.1} parent=11 // pred_check
          %p204 = pneg %p142
        $region26: #{tpu_custom_call.1} parent=11 // pred_check_branch
          %206 = sbr.rel (%p204) target = $region28
        $region27: #{tpu_custom_call.1} parent=11 // pred_region
          _
        $region28: #{tpu_custom_call.1} parent=11 // pred_fallthru
          _
      $region12: #{tpu_custom_call.1} parent=5 // pred_fallthru
        _
      %p207 = scmp.lt.s32.totalorder %s18, 4
      // Predicated region
      $region29: #{tpu_custom_call.1} parent=5 // pred_check
        %p208 = pneg %p207
      $region30: #{tpu_custom_call.1} parent=5 // pred_check_branch
        %210 = sbr.rel (%p208) target = $region32
      $region31: #{tpu_custom_call.1} parent=5 // pred_region
        // Predicated region
        $region33: #{tpu_custom_call.1} parent=31 // pred_check
          %p211 = pneg %p52
        $region34: #{tpu_custom_call.1} parent=31 // pred_check_branch
          %213 = sbr.rel (%p211) target = $region36
        $region35: #{tpu_custom_call.1} parent=31 // pred_region
          %s214 = sand.u32 %s42, 1
          %s215 = scalar_lea.sflag [#allocation3], %s214
          %s216 = sand.u32 %s42, 1
          %s217 = smul.addr %s216, 48
          %s218 = scalar_lea.vmem [#allocation2], %s217
          %s220 = ssub.s32 768, 768
          %221 = vsyncadd %s215, %s220
          %s222 = smul.addr %s26, 12
          %s223 = smul.addr %s25, 24
          %s224 = sadd.s32 %s222, %s223
          %s225 = smul.addr %s224, 64
          %s226 = scalar_lea.hbm %s0, %s225
          %s227 = sshll.u32 %s218, 4
          %s228 = int_to_ptr.vmem [resolvable:$true] %s227
          %233 = dma.hbm_to_vmem [thread:$0]  %s226, 768, %s228, %s215, 192, 192, 12
        $region36: #{tpu_custom_call.1} parent=31 // pred_fallthru
          _
      $region32: #{tpu_custom_call.1} parent=5 // pred_fallthru
        _
      %p234 = scmp.le.s32.totalorder 1, %s18
      %p235 = scmp.lt.s32.totalorder %s18, 5
      %p236 = pnand %p234, %p235
      %p237 = pneg %p236
      // Predicated region
      $region37: #{tpu_custom_call.1} parent=5 // pred_check
        _
      $region38: #{tpu_custom_call.1} parent=5 // pred_check_branch
        %239 = sbr.rel (%p236) target = $region40
      $region39: #{tpu_custom_call.1} parent=5 // pred_region
        %s240 = ssub.s32 %s18, 1
        %s241 = sand.u32 %s45, 1
        %s242 = scalar_lea.sflag [#allocation3], %s241
        %s243 = sand.u32 %s45, 1
        %s244 = smul.addr %s243, 48
        %s245 = scalar_lea.vmem [#allocation2], %s244
        // Predicated region
        $region41: #{tpu_custom_call.1} parent=39 // pred_check
          %p246 = pneg %p58
        $region42: #{tpu_custom_call.1} parent=39 // pred_check_branch
          %248 = sbr.rel (%p246) target = $region44
        $region43: #{tpu_custom_call.1} parent=39 // pred_region
          %249 = dma.done %s242, 768
        $region44: #{tpu_custom_call.1} parent=39 // pred_fallthru
          _
        // Predicated region
        $region45: #{tpu_custom_call.1} parent=39 // pred_check
          %p250 = pneg %p121
        $region46: #{tpu_custom_call.1} parent=39 // pred_check_branch
          %252 = sbr.rel (%p250) target = $region48
        $region47: #{tpu_custom_call.1} parent=39 // pred_region
          %253 = dma.done [#allocation6], 128
        $region48: #{tpu_custom_call.1} parent=39 // pred_fallthru
          _
        %s254 = sand.u32 %s45, 1
        %s255 = scalar_lea.sflag [#allocation3], %s254
        %s256 = sand.u32 %s45, 1
        %s257 = smul.addr %s256, 48
        %s258 = scalar_lea.vmem [#allocation2], %s257
        %p259 = pneg %p58
        %p260 = pneg %p55
        %p261 = pneg %p79
        %p262 = pneg %p76
        %p263 = pneg %p100
        %p264 = pneg %p97
        %p265 = pneg %p121
        %p266 = pneg %p118
        %p267 = pneg %p142
        %p268 = pneg %p139
        %p269 = pneg %p170
        %p270 = pneg %p167
        %s271 = sand.u32 %s157, 1
        %s272 = scalar_lea.sflag [#allocation4], %s271
        %s273 = sand.u32 %s157, 1
        %s274 = smul.addr %s273, 48
        %s275 = scalar_lea.vmem [#allocation7], %s274
        %v277 = vld [vmem:[%s245] sm:$0xff]
        %v278 = vld [vmem:[%s245 + $0x8] sm:$0xf]
        %v279 = vld [vmem:[%s245 + $0xc] sm:$0xff]
        %v280 = vld [vmem:[%s245 + $0x14] sm:$0xf]
        %v281 = vld [vmem:[%s245 + $0x18] sm:$0xff]
        %v282 = vld [vmem:[%s245 + $0x20] sm:$0xf]
        %v283 = vld [vmem:[%s245 + $0x24] sm:$0xff]
        %v284 = vld [vmem:[%s245 + $0x2c] sm:$0xf]
        %v293 = vunpack.c.l.b16 %v277
        %v294 = vunpack.c.h.b16 %v277
        %v295 = vunpack.c.l.b16 %v278
        %v296 = vunpack.c.l.b16 %v279
        %v297 = vunpack.c.h.b16 %v279
        %v298 = vunpack.c.l.b16 %v280
        %v299 = vunpack.c.l.b16 %v281
        %v300 = vunpack.c.h.b16 %v281
        %v301 = vunpack.c.l.b16 %v282
        %v302 = vunpack.c.l.b16 %v283
        %v303 = vunpack.c.h.b16 %v283
        %v304 = vunpack.c.l.b16 %v284
        %v305 = vpack.c.b16 %v296, %v293
        %v306 = vpack.c.b16 %v297, %v294
        %v307 = vpack.c.b16 %v298, %v295
        %v308 = vpack.c.b16 %v302, %v299
        %v309 = vpack.c.b16 %v303, %v300
        %v310 = vpack.c.b16 %v304, %v301
        %317 = vrot.lane.b32.xlu0 %v305, 127
        %v318 = vpop.permute.xlu0 %317
        %319 = vrot.lane.b32.xlu0 %v306, 127
        %v320 = vpop.permute.xlu0 %319
        %321 = vrot.lane.b32.xlu0 %v307, 127
        %v322 = vpop.permute.xlu0 %321
        %323 = vrot.lane.b32.xlu0 %v308, 127
        %v324 = vpop.permute.xlu0 %323
        %325 = vrot.lane.b32.xlu0 %v309, 127
        %v326 = vpop.permute.xlu0 %325
        %327 = vrot.lane.b32.xlu0 %v310, 127
        %v328 = vpop.permute.xlu0 %327
        %vm329 = vcmask 1039360
        %v330 = vsel %vm329, %v318, %v320
        %v331 = vsel %vm329, %v320, %v322
        %v332 = vsel %vm329, %v324, %v326
        %v333 = vsel %vm329, %v326, %v328
        %340 = vrot.lane.b32.xlu0 %v305, 126
        %v341 = vpop.permute.xlu0 %340
        %342 = vrot.lane.b32.xlu0 %v306, 126
        %v343 = vpop.permute.xlu0 %342
        %344 = vrot.lane.b32.xlu0 %v307, 126
        %v345 = vpop.permute.xlu0 %344
        %346 = vrot.lane.b32.xlu0 %v308, 126
        %v347 = vpop.permute.xlu0 %346
        %348 = vrot.lane.b32.xlu0 %v309, 126
        %v349 = vpop.permute.xlu0 %348
        %350 = vrot.lane.b32.xlu0 %v310, 126
        %v351 = vpop.permute.xlu0 %350
        %vm352 = vcmask 1031168
        %v353 = vsel %vm352, %v341, %v343
        %v354 = vsel %vm352, %v343, %v345
        %v355 = vsel %vm352, %v347, %v349
        %v356 = vsel %vm352, %v349, %v351
        %v363 = vld [vmem:[%s1] sm:$0xf]
        %v364 = vld [vmem:[%s1 + $0xc] sm:$0xf]
        %v365 = vld [vmem:[%s1 + $0x18] sm:$0xf]
        %v366 = vld [vmem:[%s1 + $0x24] sm:$0xf]
        %v367 = vld [vmem:[%s1] sm:$0xff]
        %v368 = vld [vmem:[%s1 + $0xc] sm:$0xff]
        %v369 = vld [vmem:[%s1 + $0x18] sm:$0xff]
        %v370 = vld [vmem:[%s1 + $0x24] sm:$0xff]
        %v375 = vunpack.c.l.b16 %v367
        %v376 = vunpack.c.h.b16 %v367
        %v377 = vunpack.c.l.b16 %v368
        %v378 = vunpack.c.h.b16 %v368
        %v379 = vunpack.c.l.b16 %v369
        %v380 = vunpack.c.h.b16 %v369
        %v381 = vunpack.c.l.b16 %v370
        %v382 = vunpack.c.h.b16 %v370
        %v383 = vpack.c.b16 %v377, %v375
        %v384 = vpack.c.b16 %v378, %v376
        %v385 = vpack.c.b16 %v381, %v379
        %v386 = vpack.c.b16 %v382, %v380
        %387 = vrot.lane.b32.xlu0 %v383, 32
        %v388 = vpop.permute.xlu0 %387
        %389 = vrot.lane.b32.xlu0 %v384, 32
        %v390 = vpop.permute.xlu0 %389
        %391 = vrot.lane.b32.xlu0 %v385, 32
        %v392 = vpop.permute.xlu0 %391
        %393 = vrot.lane.b32.xlu0 %v386, 32
        %v394 = vpop.permute.xlu0 %393
        %vm395 = vcmask 261120
        %v396 = vsel %vm395, %v388, %v390
        %v397 = vsel %vm395, %v392, %v394
        %398 = vrot.lane.b32.xlu0 %v305, 110
        %v399 = vpop.permute.xlu0 %398
        %400 = vrot.lane.b32.xlu0 %v306, 110
        %v401 = vpop.permute.xlu0 %400
        %402 = vrot.lane.b32.xlu0 %v307, 110
        %v403 = vpop.permute.xlu0 %402
        %404 = vrot.lane.b32.xlu0 %v308, 110
        %v405 = vpop.permute.xlu0 %404
        %406 = vrot.lane.b32.xlu0 %v309, 110
        %v407 = vpop.permute.xlu0 %406
        %408 = vrot.lane.b32.xlu0 %v310, 110
        %v409 = vpop.permute.xlu0 %408
        %410 = vrot.lane.b32.xlu0 %v330, 110
        %v411 = vpop.permute.xlu0 %410
        %412 = vrot.lane.b32.xlu0 %v331, 110
        %v413 = vpop.permute.xlu0 %412
        %414 = vrot.lane.b32.xlu0 %v322, 110
        %v415 = vpop.permute.xlu0 %414
        %416 = vrot.lane.b32.xlu0 %v332, 110
        %v417 = vpop.permute.xlu0 %416
        %418 = vrot.lane.b32.xlu0 %v333, 110
        %v419 = vpop.permute.xlu0 %418
        %420 = vrot.lane.b32.xlu0 %v328, 110
        %v421 = vpop.permute.xlu0 %420
        %422 = vrot.lane.b32.xlu0 %v353, 110
        %v423 = vpop.permute.xlu0 %422
        %424 = vrot.lane.b32.xlu0 %v354, 110
        %v425 = vpop.permute.xlu0 %424
        %426 = vrot.lane.b32.xlu0 %v345, 110
        %v427 = vpop.permute.xlu0 %426
        %428 = vrot.lane.b32.xlu0 %v355, 110
        %v429 = vpop.permute.xlu0 %428
        %430 = vrot.lane.b32.xlu0 %v356, 110
        %v431 = vpop.permute.xlu0 %430
        %432 = vrot.lane.b32.xlu0 %v351, 110
        %v433 = vpop.permute.xlu0 %432
        %vm434 = vcmask 900096
        %v435 = vsel %vm434, %v399, %v401
        %v436 = vsel %vm434, %v401, %v403
        %v437 = vsel %vm434, %v405, %v407
        %v438 = vsel %vm434, %v407, %v409
        %v439 = vsel %vm434, %v411, %v413
        %v440 = vsel %vm434, %v413, %v415
        %v441 = vsel %vm434, %v417, %v419
        %v442 = vsel %vm434, %v419, %v421
        %v443 = vsel %vm434, %v423, %v425
        %v444 = vsel %vm434, %v425, %v427
        %v445 = vsel %vm434, %v429, %v431
        %v446 = vsel %vm434, %v431, %v433
        %vm465 = vcmask 785408
        %v467 = vsel %vm465, %v396, 0
        %v470 = vsel %vm465, %v397, 0
        %472 = vmatprep.subr.bf16.mxu0 0
        %473 = vmatpush1.bf16.msra.mxu0 0
        %474 = vmatprep.subr.bf16.mxu0 0
        %475 = vmatpush1.bf16.msra.mxu0 0
        %476 = vmatprep.subr.bf16.mxu0 %v446
        %477 = vmatpush1.bf16.msra.mxu0 %v445
        %478 = vmatprep.subr.bf16.mxu0 %v444
        %479 = vmatpush1.bf16.msra.mxu0 %v443
        %480 = vmatprep.subr.bf16.mxu0 %v442
        %481 = vmatpush1.bf16.msra.mxu0 %v441
        %482 = vmatprep.subr.bf16.mxu0 %v440
        %483 = vmatpush1.bf16.msra.mxu0 %v439
        %484 = vmatprep.subr.bf16.mxu0 %v438
        %485 = vmatpush1.bf16.msra.mxu0 %v437
        %486 = vmatprep.subr.bf16.mxu0 %v436
        %487 = vmatpush1.bf16.msra.mxu0 %v435
        %488 = vmatprep.subr.bf16.mxu0 0
        %489 = vmatpush2.bf16.msra.mxu0 0
        %490 = vmatprep.subr.bf16.mxu0 0
        %491 = vmatpush2.bf16.msra.mxu0 0
        %492 = vmatprep.subr.bf16.mxu0 0
        %493 = vmatpush2.bf16.msra.mxu0 0
        %494 = vmatprep.subr.bf16.mxu0 0
        %495 = vmatpush2.bf16.msra.mxu0 0
        %496 = vmatprep.subr.bf16.mxu0 0
        %497 = vmatpush2.bf16.msra.mxu0 0
        %498 = vmatprep.subr.bf16.mxu0 0
        %499 = vmatpush2.bf16.msra.mxu0 0
        %500 = vmatprep.subr.bf16.mxu0 0
        %501 = vmatpush2.bf16.msra.mxu0 0
        %502 = vmatprep.subr.bf16.mxu0 0
        %503 = vmatpush2.bf16.msra.mxu0 0
        %504 = vmatprep.mubr.bf16.mxu0 0
        %505 = vmatmul.mubr.bf16.gmra.mxu0 %v467
        %v506 = vpop.f32.mrf.mxu0
        %v507 = vadd.f32 0.0, %v506
        %v508 = vpop.f32.mrf.mxu0
        %v509 = vadd.f32 0.0, %v508
        %v510 = vpop.f32.mrf.mxu0
        %v511 = vadd.f32 0.0, %v510
        %v512 = vpop.f32.mrf.mxu0
        %v513 = vadd.f32 0.0, %v512
        %514 = vmatprep.mubr.bf16.mxu0 0
        %515 = vmatmul.mubr.bf16.gmra.mxu0 %v470
        %v516 = vpop.f32.mrf.mxu0
        %v517 = vadd.f32 0.0, %v516
        %v518 = vpop.f32.mrf.mxu0
        %v519 = vadd.f32 0.0, %v518
        %v520 = vpop.f32.mrf.mxu0
        %v521 = vadd.f32 0.0, %v520
        %v522 = vpop.f32.mrf.mxu0
        %v523 = vadd.f32 0.0, %v522
        %524 = vdwg.mxu0
        %525 = vmatprep.subr.bf16.mxu0 0
        %526 = vmatpush1.bf16.msra.mxu0 0
        %527 = vmatprep.subr.bf16.mxu0 0
        %528 = vmatpush1.bf16.msra.mxu0 0
        %529 = vmatprep.subr.bf16.mxu0 0
        %530 = vmatpush1.bf16.msra.mxu0 %v433
        %531 = vmatprep.subr.bf16.mxu0 0
        %532 = vmatpush1.bf16.msra.mxu0 %v427
        %533 = vmatprep.subr.bf16.mxu0 0
        %534 = vmatpush1.bf16.msra.mxu0 %v421
        %535 = vmatprep.subr.bf16.mxu0 0
        %536 = vmatpush1.bf16.msra.mxu0 %v415
        %537 = vmatprep.subr.bf16.mxu0 0
        %538 = vmatpush1.bf16.msra.mxu0 %v409
        %539 = vmatprep.subr.bf16.mxu0 0
        %540 = vmatpush1.bf16.msra.mxu0 %v403
        %541 = vmatprep.subr.bf16.mxu0 0
        %542 = vmatpush2.bf16.msra.mxu0 0
        %543 = vmatprep.subr.bf16.mxu0 0
        %544 = vmatpush2.bf16.msra.mxu0 0
        %545 = vmatprep.subr.bf16.mxu0 0
        %546 = vmatpush2.bf16.msra.mxu0 0
        %547 = vmatprep.subr.bf16.mxu0 0
        %548 = vmatpush2.bf16.msra.mxu0 0
        %549 = vmatprep.subr.bf16.mxu0 0
        %550 = vmatpush2.bf16.msra.mxu0 0
        %551 = vmatprep.subr.bf16.mxu0 0
        %552 = vmatpush2.bf16.msra.mxu0 0
        %553 = vmatprep.subr.bf16.mxu0 0
        %554 = vmatpush2.bf16.msra.mxu0 0
        %555 = vmatprep.subr.bf16.mxu0 0
        %556 = vmatpush2.bf16.msra.mxu0 0
        %557 = vmatprep.mubr.bf16.mxu0 0
        %558 = vmatmul.mubr.bf16.gmra.mxu0 %v467
        %v559 = vpop.f32.mrf.mxu0
        %v560 = vadd.f32 0.0, %v559
        %v561 = vpop.f32.mrf.mxu0
        %v562 = vpop.f32.mrf.mxu0
        %v563 = vadd.f32 0.0, %v562
        %v564 = vpop.f32.mrf.mxu0
        %565 = vmatprep.mubr.bf16.mxu0 0
        %566 = vmatmul.mubr.bf16.gmra.mxu0 %v470
        %v567 = vpop.f32.mrf.mxu0
        %v568 = vadd.f32 0.0, %v567
        %v569 = vpop.f32.mrf.mxu0
        %v570 = vpop.f32.mrf.mxu0
        %v571 = vadd.f32 0.0, %v570
        %v572 = vpop.f32.mrf.mxu0
        %573 = vdwg.mxu0
        %v578 = vunpack.c.l.b16 %v363
        %v579 = vunpack.c.l.b16 %v364
        %v580 = vunpack.c.l.b16 %v365
        %v581 = vunpack.c.l.b16 %v366
        %v582 = vpack.c.b16 %v579, %v578
        %v583 = vpack.c.b16 %v581, %v580
        %v585 = vsel %vm465, %v582, 0
        %v588 = vsel %vm465, %v583, 0
        %590 = vmatprep.subr.bf16.mxu0 0
        %591 = vmatpush1.bf16.msra.mxu0 0
        %592 = vmatprep.subr.bf16.mxu0 0
        %593 = vmatpush1.bf16.msra.mxu0 0
        %594 = vmatprep.subr.bf16.mxu0 %v356
        %595 = vmatpush1.bf16.msra.mxu0 %v355
        %596 = vmatprep.subr.bf16.mxu0 %v354
        %597 = vmatpush1.bf16.msra.mxu0 %v353
        %598 = vmatprep.subr.bf16.mxu0 %v333
        %599 = vmatpush1.bf16.msra.mxu0 %v332
        %600 = vmatprep.subr.bf16.mxu0 %v331
        %601 = vmatpush1.bf16.msra.mxu0 %v330
        %602 = vmatprep.subr.bf16.mxu0 %v309
        %603 = vmatpush1.bf16.msra.mxu0 %v308
        %604 = vmatprep.subr.bf16.mxu0 %v306
        %605 = vmatpush1.bf16.msra.mxu0 %v305
        %606 = vmatprep.subr.bf16.mxu0 0
        %607 = vmatpush2.bf16.msra.mxu0 0
        %608 = vmatprep.subr.bf16.mxu0 0
        %609 = vmatpush2.bf16.msra.mxu0 0
        %610 = vmatprep.subr.bf16.mxu0 0
        %611 = vmatpush2.bf16.msra.mxu0 0
        %612 = vmatprep.subr.bf16.mxu0 0
        %613 = vmatpush2.bf16.msra.mxu0 0
        %614 = vmatprep.subr.bf16.mxu0 0
        %615 = vmatpush2.bf16.msra.mxu0 0
        %616 = vmatprep.subr.bf16.mxu0 0
        %617 = vmatpush2.bf16.msra.mxu0 0
        %618 = vmatprep.subr.bf16.mxu0 0
        %619 = vmatpush2.bf16.msra.mxu0 0
        %620 = vmatprep.subr.bf16.mxu0 0
        %621 = vmatpush2.bf16.msra.mxu0 0
        %622 = vmatprep.mubr.bf16.mxu0 0
        %623 = vmatmul.mubr.bf16.gmra.mxu0 %v585
        %v624 = vpop.f32.mrf.mxu0
        %v625 = vadd.f32 %v507, %v624
        %v626 = vpop.f32.mrf.mxu0
        %v627 = vadd.f32 %v509, %v626
        %v628 = vpop.f32.mrf.mxu0
        %v629 = vadd.f32 %v511, %v628
        %v630 = vpop.f32.mrf.mxu0
        %v631 = vadd.f32 %v513, %v630
        %632 = vmatprep.mubr.bf16.mxu0 0
        %633 = vmatmul.mubr.bf16.gmra.mxu0 %v588
        %v634 = vpop.f32.mrf.mxu0
        %v635 = vadd.f32 %v517, %v634
        %v636 = vpop.f32.mrf.mxu0
        %v637 = vadd.f32 %v519, %v636
        %v638 = vpop.f32.mrf.mxu0
        %v639 = vadd.f32 %v521, %v638
        %v640 = vpop.f32.mrf.mxu0
        %v641 = vadd.f32 %v523, %v640
        %642 = vdwg.mxu0
        %643 = vmatprep.subr.bf16.mxu0 0
        %644 = vmatpush1.bf16.msra.mxu0 0
        %645 = vmatprep.subr.bf16.mxu0 0
        %646 = vmatpush1.bf16.msra.mxu0 0
        %647 = vmatprep.subr.bf16.mxu0 0
        %648 = vmatpush1.bf16.msra.mxu0 %v351
        %649 = vmatprep.subr.bf16.mxu0 0
        %650 = vmatpush1.bf16.msra.mxu0 %v345
        %651 = vmatprep.subr.bf16.mxu0 0
        %652 = vmatpush1.bf16.msra.mxu0 %v328
        %653 = vmatprep.subr.bf16.mxu0 0
        %654 = vmatpush1.bf16.msra.mxu0 %v322
        %655 = vmatprep.subr.bf16.mxu0 0
        %656 = vmatpush1.bf16.msra.mxu0 %v310
        %657 = vmatprep.subr.bf16.mxu0 0
        %658 = vmatpush1.bf16.msra.mxu0 %v307
        %659 = vmatprep.subr.bf16.mxu0 0
        %660 = vmatpush2.bf16.msra.mxu0 0
        %661 = vmatprep.subr.bf16.mxu0 0
        %662 = vmatpush2.bf16.msra.mxu0 0
        %663 = vmatprep.subr.bf16.mxu0 0
        %664 = vmatpush2.bf16.msra.mxu0 0
        %665 = vmatprep.subr.bf16.mxu0 0
        %666 = vmatpush2.bf16.msra.mxu0 0
        %667 = vmatprep.subr.bf16.mxu0 0
        %668 = vmatpush2.bf16.msra.mxu0 0
        %669 = vmatprep.subr.bf16.mxu0 0
        %670 = vmatpush2.bf16.msra.mxu0 0
        %671 = vmatprep.subr.bf16.mxu0 0
        %672 = vmatpush2.bf16.msra.mxu0 0
        %673 = vmatprep.subr.bf16.mxu0 0
        %674 = vmatpush2.bf16.msra.mxu0 0
        %675 = vmatprep.mubr.bf16.mxu0 0
        %676 = vmatmul.mubr.bf16.gmra.mxu0 %v585
        %v677 = vpop.f32.mrf.mxu0
        %v678 = vadd.f32 %v560, %v677
        %v679 = vpop.f32.mrf.mxu0
        %v680 = vpop.f32.mrf.mxu0
        %v681 = vadd.f32 %v563, %v680
        %v682 = vpop.f32.mrf.mxu0
        %683 = vmatprep.mubr.bf16.mxu0 0
        %684 = vmatmul.mubr.bf16.gmra.mxu0 %v588
        %v685 = vpop.f32.mrf.mxu0
        %v686 = vadd.f32 %v568, %v685
        %v687 = vpop.f32.mrf.mxu0
        %v688 = vpop.f32.mrf.mxu0
        %v689 = vadd.f32 %v571, %v688
        %v690 = vpop.f32.mrf.mxu0
        %691 = vdwg.mxu0
        %v692 = vld [vmem:[%s1 + $0x4] sm:$0xff]
        %v693 = vld [vmem:[%s1 + $0x10] sm:$0xff]
        %v694 = vld [vmem:[%s1 + $0x1c] sm:$0xff]
        %v695 = vld [vmem:[%s1 + $0x28] sm:$0xff]
        %v700 = vunpack.c.l.b16 %v692
        %v701 = vunpack.c.h.b16 %v692
        %v702 = vunpack.c.l.b16 %v693
        %v703 = vunpack.c.h.b16 %v693
        %v704 = vunpack.c.l.b16 %v694
        %v705 = vunpack.c.h.b16 %v694
        %v706 = vunpack.c.l.b16 %v695
        %v707 = vunpack.c.h.b16 %v695
        %v708 = vpack.c.b16 %v702, %v700
        %v709 = vpack.c.b16 %v703, %v701
        %v710 = vpack.c.b16 %v706, %v704
        %v711 = vpack.c.b16 %v707, %v705
        %712 = vrot.lane.b32.xlu0 %v708, 64
        %v713 = vpop.permute.xlu0 %712
        %714 = vrot.lane.b32.xlu0 %v709, 64
        %v715 = vpop.permute.xlu0 %714
        %716 = vrot.lane.b32.xlu0 %v710, 64
        %v717 = vpop.permute.xlu0 %716
        %718 = vrot.lane.b32.xlu0 %v711, 64
        %v719 = vpop.permute.xlu0 %718
        %vm720 = vcmask 523264
        %v721 = vsel %vm720, %v713, %v715
        %v722 = vsel %vm720, %v717, %v719
        %723 = vrot.lane.b32.xlu0 %v305, 92
        %v724 = vpop.permute.xlu0 %723
        %725 = vrot.lane.b32.xlu0 %v306, 92
        %v726 = vpop.permute.xlu0 %725
        %727 = vrot.lane.b32.xlu0 %v307, 92
        %v728 = vpop.permute.xlu0 %727
        %729 = vrot.lane.b32.xlu0 %v308, 92
        %v730 = vpop.permute.xlu0 %729
        %731 = vrot.lane.b32.xlu0 %v309, 92
        %v732 = vpop.permute.xlu0 %731
        %733 = vrot.lane.b32.xlu0 %v310, 92
        %v734 = vpop.permute.xlu0 %733
        %735 = vrot.lane.b32.xlu0 %v330, 92
        %v736 = vpop.permute.xlu0 %735
        %737 = vrot.lane.b32.xlu0 %v331, 92
        %v738 = vpop.permute.xlu0 %737
        %739 = vrot.lane.b32.xlu0 %v322, 92
        %v740 = vpop.permute.xlu0 %739
        %741 = vrot.lane.b32.xlu0 %v332, 92
        %v742 = vpop.permute.xlu0 %741
        %743 = vrot.lane.b32.xlu0 %v333, 92
        %v744 = vpop.permute.xlu0 %743
        %745 = vrot.lane.b32.xlu0 %v328, 92
        %v746 = vpop.permute.xlu0 %745
        %747 = vrot.lane.b32.xlu0 %v353, 92
        %v748 = vpop.permute.xlu0 %747
        %749 = vrot.lane.b32.xlu0 %v354, 92
        %v750 = vpop.permute.xlu0 %749
        %751 = vrot.lane.b32.xlu0 %v345, 92
        %v752 = vpop.permute.xlu0 %751
        %753 = vrot.lane.b32.xlu0 %v355, 92
        %v754 = vpop.permute.xlu0 %753
        %755 = vrot.lane.b32.xlu0 %v356, 92
        %v756 = vpop.permute.xlu0 %755
        %757 = vrot.lane.b32.xlu0 %v351, 92
        %v758 = vpop.permute.xlu0 %757
        %vm759 = vcmask 752640
        %v760 = vsel %vm759, %v724, %v726
        %v761 = vsel %vm759, %v726, %v728
        %v762 = vsel %vm759, %v730, %v732
        %v763 = vsel %vm759, %v732, %v734
        %v764 = vsel %vm759, %v736, %v738
        %v765 = vsel %vm759, %v738, %v740
        %v766 = vsel %vm759, %v742, %v744
        %v767 = vsel %vm759, %v744, %v746
        %v768 = vsel %vm759, %v748, %v750
        %v769 = vsel %vm759, %v750, %v752
        %v770 = vsel %vm759, %v754, %v756
        %v771 = vsel %vm759, %v756, %v758
        %v791 = vsel %vm465, %v721, 0
        %v794 = vsel %vm465, %v722, 0
        %796 = vmatprep.subr.bf16.mxu0 0
        %797 = vmatpush1.bf16.msra.mxu0 0
        %798 = vmatprep.subr.bf16.mxu0 0
        %799 = vmatpush1.bf16.msra.mxu0 0
        %800 = vmatprep.subr.bf16.mxu0 %v771
        %801 = vmatpush1.bf16.msra.mxu0 %v770
        %802 = vmatprep.subr.bf16.mxu0 %v769
        %803 = vmatpush1.bf16.msra.mxu0 %v768
        %804 = vmatprep.subr.bf16.mxu0 %v767
        %805 = vmatpush1.bf16.msra.mxu0 %v766
        %806 = vmatprep.subr.bf16.mxu0 %v765
        %807 = vmatpush1.bf16.msra.mxu0 %v764
        %808 = vmatprep.subr.bf16.mxu0 %v763
        %809 = vmatpush1.bf16.msra.mxu0 %v762
        %810 = vmatprep.subr.bf16.mxu0 %v761
        %811 = vmatpush1.bf16.msra.mxu0 %v760
        %812 = vmatprep.subr.bf16.mxu0 0
        %813 = vmatpush2.bf16.msra.mxu0 0
        %814 = vmatprep.subr.bf16.mxu0 0
        %815 = vmatpush2.bf16.msra.mxu0 0
        %816 = vmatprep.subr.bf16.mxu0 0
        %817 = vmatpush2.bf16.msra.mxu0 0
        %818 = vmatprep.subr.bf16.mxu0 0
        %819 = vmatpush2.bf16.msra.mxu0 0
        %820 = vmatprep.subr.bf16.mxu0 0
        %821 = vmatpush2.bf16.msra.mxu0 0
        %822 = vmatprep.subr.bf16.mxu0 0
        %823 = vmatpush2.bf16.msra.mxu0 0
        %824 = vmatprep.subr.bf16.mxu0 0
        %825 = vmatpush2.bf16.msra.mxu0 0
        %826 = vmatprep.subr.bf16.mxu0 0
        %827 = vmatpush2.bf16.msra.mxu0 0
        %828 = vmatprep.mubr.bf16.mxu0 0
        %829 = vmatmul.mubr.bf16.gmra.mxu0 %v791
        %v830 = vpop.f32.mrf.mxu0
        %v831 = vadd.f32 0.0, %v830
        %v832 = vpop.f32.mrf.mxu0
        %v833 = vadd.f32 0.0, %v832
        %v834 = vpop.f32.mrf.mxu0
        %v835 = vadd.f32 0.0, %v834
        %v836 = vpop.f32.mrf.mxu0
        %v837 = vadd.f32 0.0, %v836
        %838 = vmatprep.mubr.bf16.mxu0 0
        %839 = vmatmul.mubr.bf16.gmra.mxu0 %v794
        %v840 = vpop.f32.mrf.mxu0
        %v841 = vadd.f32 0.0, %v840
        %v842 = vpop.f32.mrf.mxu0
        %v843 = vadd.f32 0.0, %v842
        %v844 = vpop.f32.mrf.mxu0
        %v845 = vadd.f32 0.0, %v844
        %v846 = vpop.f32.mrf.mxu0
        %v847 = vadd.f32 0.0, %v846
        %848 = vdwg.mxu0
        %849 = vmatprep.subr.bf16.mxu0 0
        %850 = vmatpush1.bf16.msra.mxu0 0
        %851 = vmatprep.subr.bf16.mxu0 0
        %852 = vmatpush1.bf16.msra.mxu0 0
        %853 = vmatprep.subr.bf16.mxu0 0
        %854 = vmatpush1.bf16.msra.mxu0 %v758
        %855 = vmatprep.subr.bf16.mxu0 0
        %856 = vmatpush1.bf16.msra.mxu0 %v752
        %857 = vmatprep.subr.bf16.mxu0 0
        %858 = vmatpush1.bf16.msra.mxu0 %v746
        %859 = vmatprep.subr.bf16.mxu0 0
        %860 = vmatpush1.bf16.msra.mxu0 %v740
        %861 = vmatprep.subr.bf16.mxu0 0
        %862 = vmatpush1.bf16.msra.mxu0 %v734
        %863 = vmatprep.subr.bf16.mxu0 0
        %864 = vmatpush1.bf16.msra.mxu0 %v728
        %865 = vmatprep.subr.bf16.mxu0 0
        %866 = vmatpush2.bf16.msra.mxu0 0
        %867 = vmatprep.subr.bf16.mxu0 0
        %868 = vmatpush2.bf16.msra.mxu0 0
        %869 = vmatprep.subr.bf16.mxu0 0
        %870 = vmatpush2.bf16.msra.mxu0 0
        %871 = vmatprep.subr.bf16.mxu0 0
        %872 = vmatpush2.bf16.msra.mxu0 0
        %873 = vmatprep.subr.bf16.mxu0 0
        %874 = vmatpush2.bf16.msra.mxu0 0
        %875 = vmatprep.subr.bf16.mxu0 0
        %876 = vmatpush2.bf16.msra.mxu0 0
        %877 = vmatprep.subr.bf16.mxu0 0
        %878 = vmatpush2.bf16.msra.mxu0 0
        %879 = vmatprep.subr.bf16.mxu0 0
        %880 = vmatpush2.bf16.msra.mxu0 0
        %881 = vmatprep.mubr.bf16.mxu0 0
        %882 = vmatmul.mubr.bf16.gmra.mxu0 %v791
        %v883 = vpop.f32.mrf.mxu0
        %v884 = vadd.f32 0.0, %v883
        %v885 = vpop.f32.mrf.mxu0
        %v886 = vpop.f32.mrf.mxu0
        %v887 = vadd.f32 0.0, %v886
        %v888 = vpop.f32.mrf.mxu0
        %889 = vmatprep.mubr.bf16.mxu0 0
        %890 = vmatmul.mubr.bf16.gmra.mxu0 %v794
        %v891 = vpop.f32.mrf.mxu0
        %v892 = vadd.f32 0.0, %v891
        %v893 = vpop.f32.mrf.mxu0
        %v894 = vpop.f32.mrf.mxu0
        %v895 = vadd.f32 0.0, %v894
        %v896 = vpop.f32.mrf.mxu0
        %897 = vdwg.mxu0
        %v898 = vadd.f32 %v625, %v831
        %v899 = vadd.f32 %v627, %v833
        %v900 = vadd.f32 %v678, %v884
        %v901 = vadd.f32 %v629, %v835
        %v902 = vadd.f32 %v631, %v837
        %v903 = vadd.f32 %v681, %v887
        %v904 = vadd.f32 %v635, %v841
        %v905 = vadd.f32 %v637, %v843
        %v906 = vadd.f32 %v686, %v892
        %v907 = vadd.f32 %v639, %v845
        %v908 = vadd.f32 %v641, %v847
        %v909 = vadd.f32 %v689, %v895
        %v910 = vld [vmem:[%s2] sm:$0xff]
        %v911 = vld [vmem:[%s2 + $0x8] sm:$0xff]
        %v912 = vld [vmem:[%s2 + $0x10] sm:$0xff]
        %v913 = vld [vmem:[%s2 + $0x18] sm:$0xff]
        %915 = vset.pattern.permute.xlu0 0
        %916 = vperm.xlu0 %915, %v910
        %v917 = vpop.permute.xlu0 %916
        %920 = vset.pattern.permute.xlu0 0
        %921 = vperm.xlu0 %920, %v911
        %v922 = vpop.permute.xlu0 %921
        %925 = vset.pattern.permute.xlu0 0
        %926 = vperm.xlu0 %925, %v912
        %v927 = vpop.permute.xlu0 %926
        %930 = vset.pattern.permute.xlu0 0
        %931 = vperm.xlu0 %930, %v913
        %v932 = vpop.permute.xlu0 %931
        %v934 = vadd.f32 %v898, %v917
        %v935 = vadd.f32 %v899, %v917
        %v936 = vadd.f32 %v900, %v917
        %v937 = vadd.f32 %v901, %v922
        %v938 = vadd.f32 %v902, %v922
        %v939 = vadd.f32 %v903, %v922
        %v940 = vadd.f32 %v904, %v927
        %v941 = vadd.f32 %v905, %v927
        %v942 = vadd.f32 %v906, %v927
        %v943 = vadd.f32 %v907, %v932
        %v944 = vadd.f32 %v908, %v932
        %v945 = vadd.f32 %v909, %v932
        %v946 = vmax.f32 %v934, 0.0
        %v947 = vmax.f32 %v935, 0.0
        %v948 = vmax.f32 %v936, 0.0
        %v949 = vmax.f32 %v937, 0.0
        %v950 = vmax.f32 %v938, 0.0
        %v951 = vmax.f32 %v939, 0.0
        %v952 = vmax.f32 %v940, 0.0
        %v953 = vmax.f32 %v941, 0.0
        %v954 = vmax.f32 %v942, 0.0
        %v955 = vmax.f32 %v943, 0.0
        %v956 = vmax.f32 %v944, 0.0
        %v957 = vmax.f32 %v945, 0.0
        %v958 = vld [vmem:[#allocation5] sm:$0xf]
        %v959 = vld [vmem:[#allocation5 + $0x4] sm:$0xf]
        %v960 = vpack.c.bf16 %v949, %v946
        %v961 = vpack.c.bf16 %v950, %v947
        %v962 = vpack.c.bf16 %v951, %v948
        %v963 = vpack.c.bf16 %v955, %v952
        %v964 = vpack.c.bf16 %v956, %v953
        %v965 = vpack.c.bf16 %v957, %v954
        %v966 = vld [vmem:[%s4] sm:$0xff]
        %v967 = vld [vmem:[%s4 + $0x8] sm:$0xff]
        %969 = vset.pattern.permute.xlu0 0
        %970 = vperm.xlu0 %969, %v966
        %v971 = vpop.permute.xlu0 %970
        %974 = vset.pattern.permute.xlu0 0
        %975 = vperm.xlu0 %974, %v967
        %v976 = vpop.permute.xlu0 %975
        %v980 = vunpack.c.l.b16 %v958
        %v981 = vunpack.c.l.b16 %v959
        %v982 = vpack.c.b16 %v981, %v980
        %vm983 = vcmask 261120
        %v985 = vsel %vm983, %v982, 0
        %987 = vmatprep.subr.bf16.mxu0 0
        %988 = vmatpush1.bf16.msra.mxu0 0
        %989 = vmatprep.subr.bf16.mxu0 0
        %990 = vmatpush1.bf16.msra.mxu0 0
        %991 = vmatprep.subr.bf16.mxu0 0
        %992 = vmatpush1.bf16.msra.mxu0 0
        %993 = vmatprep.subr.bf16.mxu0 0
        %994 = vmatpush1.bf16.msra.mxu0 0
        %995 = vmatprep.subr.bf16.mxu0 0
        %996 = vmatpush1.bf16.msra.mxu0 0
        %997 = vmatprep.subr.bf16.mxu0 0
        %998 = vmatpush1.bf16.msra.mxu0 0
        %999 = vmatprep.subr.bf16.mxu0 %v964
        %1000 = vmatpush1.bf16.msra.mxu0 %v963
        %1001 = vmatprep.subr.bf16.mxu0 %v961
        %1002 = vmatpush1.bf16.msra.mxu0 %v960
        %1003 = vmatprep.subr.bf16.mxu0 0
        %1004 = vmatpush2.bf16.msra.mxu0 0
        %1005 = vmatprep.subr.bf16.mxu0 0
        %1006 = vmatpush2.bf16.msra.mxu0 0
        %1007 = vmatprep.subr.bf16.mxu0 0
        %1008 = vmatpush2.bf16.msra.mxu0 0
        %1009 = vmatprep.subr.bf16.mxu0 0
        %1010 = vmatpush2.bf16.msra.mxu0 0
        %1011 = vmatprep.subr.bf16.mxu0 0
        %1012 = vmatpush2.bf16.msra.mxu0 0
        %1013 = vmatprep.subr.bf16.mxu0 0
        %1014 = vmatpush2.bf16.msra.mxu0 0
        %1015 = vmatprep.subr.bf16.mxu0 0
        %1016 = vmatpush2.bf16.msra.mxu0 0
        %1017 = vmatprep.subr.bf16.mxu0 0
        %1018 = vmatpush2.bf16.msra.mxu0 0
        %1019 = vmatprep.mubr.bf16.mxu0 0
        %1020 = vmatmul.mubr.bf16.gmra.mxu0 %v985
        %v1021 = vpop.f32.mrf.mxu0
        %v1022 = vadd.f32 %v971, %v1021
        %v1023 = vpop.f32.mrf.mxu0
        %v1024 = vadd.f32 %v971, %v1023
        %v1025 = vpop.f32.mrf.mxu0
        %v1026 = vadd.f32 %v976, %v1025
        %v1027 = vpop.f32.mrf.mxu0
        %v1028 = vadd.f32 %v976, %v1027
        %1029 = vdwg.mxu0
        %1030 = vmatprep.subr.bf16.mxu0 0
        %1031 = vmatpush1.bf16.msra.mxu0 0
        %1032 = vmatprep.subr.bf16.mxu0 0
        %1033 = vmatpush1.bf16.msra.mxu0 0
        %1034 = vmatprep.subr.bf16.mxu0 0
        %1035 = vmatpush1.bf16.msra.mxu0 0
        %1036 = vmatprep.subr.bf16.mxu0 0
        %1037 = vmatpush1.bf16.msra.mxu0 0
        %1038 = vmatprep.subr.bf16.mxu0 0
        %1039 = vmatpush1.bf16.msra.mxu0 0
        %1040 = vmatprep.subr.bf16.mxu0 0
        %1041 = vmatpush1.bf16.msra.mxu0 0
        %1042 = vmatprep.subr.bf16.mxu0 0
        %1043 = vmatpush1.bf16.msra.mxu0 %v965
        %1044 = vmatprep.subr.bf16.mxu0 0
        %1045 = vmatpush1.bf16.msra.mxu0 %v962
        %1046 = vmatprep.subr.bf16.mxu0 0
        %1047 = vmatpush2.bf16.msra.mxu0 0
        %1048 = vmatprep.subr.bf16.mxu0 0
        %1049 = vmatpush2.bf16.msra.mxu0 0
        %1050 = vmatprep.subr.bf16.mxu0 0
        %1051 = vmatpush2.bf16.msra.mxu0 0
        %1052 = vmatprep.subr.bf16.mxu0 0
        %1053 = vmatpush2.bf16.msra.mxu0 0
        %1054 = vmatprep.subr.bf16.mxu0 0
        %1055 = vmatpush2.bf16.msra.mxu0 0
        %1056 = vmatprep.subr.bf16.mxu0 0
        %1057 = vmatpush2.bf16.msra.mxu0 0
        %1058 = vmatprep.subr.bf16.mxu0 0
        %1059 = vmatpush2.bf16.msra.mxu0 0
        %1060 = vmatprep.subr.bf16.mxu0 0
        %1061 = vmatpush2.bf16.msra.mxu0 0
        %1062 = vmatprep.mubr.bf16.mxu0 0
        %1063 = vmatmul.mubr.bf16.gmra.mxu0 %v985
        %v1064 = vpop.f32.mrf.mxu0
        %v1065 = vadd.f32 %v971, %v1064
        %v1066 = vpop.f32.mrf.mxu0
        %v1067 = vpop.f32.mrf.mxu0
        %v1068 = vadd.f32 %v976, %v1067
        %v1069 = vpop.f32.mrf.mxu0
        %1070 = vdwg.mxu0
        %1071 = vst [vmem:[%s275] sm:$0xff] %v1022
        %1072 = vst [vmem:[%s275 + $0x8] sm:$0xff] %v1024
        %1073 = vst.msk [vmem:[%s275 + $0x10] sm:$0xff] %vm983, %v1065
        %1074 = vst [vmem:[%s275 + $0x18] sm:$0xff] %v1026
        %1075 = vst [vmem:[%s275 + $0x20] sm:$0xff] %v1028
        %1076 = vst.msk [vmem:[%s275 + $0x28] sm:$0xff] %vm983, %v1068
        %s1077 = sand.u32 %s157, 1
        %s1078 = scalar_lea.sflag [#allocation4], %s1077
        %s1079 = sand.u32 %s157, 1
        %s1080 = smul.addr %s1079, 48
        %s1081 = scalar_lea.vmem [#allocation7], %s1080
        // Predicated region
        $region49: #{tpu_custom_call.1} parent=39 // pred_check
          %p1082 = pneg %p167
        $region50: #{tpu_custom_call.1} parent=39 // pred_check_branch
          %1084 = sbr.rel (%p1082) target = $region52
        $region51: #{tpu_custom_call.1} parent=39 // pred_region
          %s1086 = ssub.s32 768, 768
          %1087 = vsyncadd %s1078, %s1086
          %s1088 = smul.addr %s28, 6
          %s1089 = smul.addr %s27, 12
          %s1090 = sadd.s32 %s1088, %s1089
          %s1091 = smul.addr %s1090, 128
          %s1092 = scalar_lea.hbm %s5, %s1091
          %s1093 = sshll.u32 %s1081, 4
          %s1094 = int_to_ptr.vmem [resolvable:$true] %s1093
          %1099 = dma.vmem_to_hbm [thread:$0]  %s1094, 768, %s1092, %s1078, 384, 384, 24
        $region52: #{tpu_custom_call.1} parent=39 // pred_fallthru
          _
      $region40: #{tpu_custom_call.1} parent=5 // pred_fallthru
        _
      %p1100 = scmp.le.s32.totalorder 2, %s18
      // Predicated region
      $region53: #{tpu_custom_call.1} parent=5 // pred_check
        %p1101 = pneg %p1100
      $region54: #{tpu_custom_call.1} parent=5 // pred_check_branch
        %1103 = sbr.rel (%p1101) target = $region56
      $region55: #{tpu_custom_call.1} parent=5 // pred_region
        %s1104 = ssub.s32 %s18, 2
        // Predicated region
        $region57: #{tpu_custom_call.1} parent=55 // pred_check
          %p1105 = pneg %p173
        $region58: #{tpu_custom_call.1} parent=55 // pred_check_branch
          %1107 = sbr.rel (%p1105) target = $region60
        $region59: #{tpu_custom_call.1} parent=55 // pred_region
          %s1108 = sand.u32 %s158, 1
          %s1109 = scalar_lea.sflag [#allocation4], %s1108
          %s1110 = sand.u32 %s158, 1
          %s1111 = smul.addr %s1110, 48
          %s1112 = scalar_lea.vmem [#allocation7], %s1111
          %1113 = dma.done %s1109, 768
        $region60: #{tpu_custom_call.1} parent=55 // pred_fallthru
          _
      $region56: #{tpu_custom_call.1} parent=5 // pred_fallthru
        _
    $region6: #{tpu_custom_call.1} parent=1 // loop_footer
      %s22 = sadd.s32 1, %s18
    $region7: #{tpu_custom_call.1} parent=1 // loop_footer_branch
      %17 = sbr.rel target = $region3
    $region8: #{tpu_custom_call.1} parent=1 // loop_exit
      _
    %1114 = vsyncpa [#allocation3], 1
    %s1115 = scalar_lea.sflag [#allocation3], 1
    %1116 = vsyncpa %s1115, 1
    %1117 = vsyncpa [#allocation6], 1
    %1118 = vsyncpa [#allocation4], 1
    %s1119 = scalar_lea.sflag [#allocation4], 1
    %1120 = vsyncpa %s1119, 1

</llo_original>
